<compile_context>
chip_gen: v7x
topology: tpu7x:2x2x1
jax: 0.10.0
libtpu: 0.0.40
codegen_flags: <defaults>
</compile_context>

<pallas_src>
import functools

import jax
import jax.numpy as jnp
from jax.experimental import pallas as pl
from jax.experimental.pallas import tpu as pltpu

_LANE = 128
_SUBLANE = 8
_OUT_LANES = 128  # lane-dense output slab width


def _round_up(x, m):
    return ((x + m - 1) // m) * m


def _vmem_budget_bytes():
    """(physical VMEM, per-call working-set budget) with cross-gen headroom."""
    try:
        cap = int(pltpu.get_tpu_info().vmem_capacity_bytes)
    except Exception:
        cap = 64 * 1024 * 1024  # conservative fallback: v7x per-TC physical VMEM
    # ~60% of physical, capped at 48 MiB, leaves room for compiler scratch.
    return cap, min(int(cap * 0.6), 48 * 1024 * 1024)


def _sample_next_word_kernel(lp_ref, it_ref, val_ref, m_sc, idx_sc, *,
                             v_total, tile_v, mask_tail):
    """Running row-wise (max, argmax) across the vocab grid axis (axis 1)."""
    k = pl.program_id(1)

    @pl.when(k == 0)
    def _init():
        m_sc[...] = jnp.full_like(m_sc, -jnp.inf)
        idx_sc[...] = jnp.zeros_like(idx_sc)

    lp = lp_ref[...]                                     # (tile_b, tile_v), native dtype
    tb, tv = lp.shape
    # LOCAL column iota only; the global offset (k * tile_v) is added to the
    # tiny (tile_b, 1) reduced result below, not to every element.
    local_col = jax.lax.broadcasted_iota(jnp.int32, (tb, tv), 1)

    if mask_tail:
        # Only emitted when V % tile_v != 0.  `limit >= tile_v` on interior
        # blocks, so only the tail block's padded lanes are actually changed.
        limit = v_total - k * tile_v
        lp = jnp.where(local_col < limit, lp, jnp.asarray(-jnp.inf, lp.dtype))

    # Block-local max / first-max-index in the input's native dtype.
    blk_max = jnp.max(lp, axis=-1, keepdims=True)        # (tile_b, 1)
    sentinel = jnp.iinfo(jnp.int32).max
    blk_idx = jnp.min(jnp.where(lp == blk_max, local_col, sentinel),
                      axis=-1, keepdims=True) + k * tile_v

    # Promote only the tiny (tile_b,1) block max for the running f32 carry.
    # Strict '>' keeps the FIRST maximal index across vocab blocks (matches
    # torch.max / jnp.argmax first-occurrence tie-breaking).
    blk_max_f32 = blk_max.astype(jnp.float32)
    better = blk_max_f32 > m_sc[...]
    idx_sc[...] = jnp.where(better, blk_idx, idx_sc[...])
    m_sc[...] = jnp.where(better, blk_max_f32, m_sc[...])

    @pl.when(k == pl.num_programs(1) - 1)
    def _finalize():
        # Lane-dense (tile_b, 128) slabs -> unmasked full-width writeback.
        it_ref[...] = jnp.broadcast_to(idx_sc[...], it_ref.shape)
        val_ref[...] = jnp.broadcast_to(m_sc[...], val_ref.shape).astype(val_ref.dtype)


def sample_next_word_pallas(logprobs, *, tile_b=None, tile_v=None):
    """Row-wise (argmax, max) over dim 1 of logprobs [B, V].

    Returns (it: [B] int32, sampleLogprobs: [B] logprobs.dtype).
    """
    B, V = logprobs.shape
    itemsize = jnp.dtype(logprobs.dtype).itemsize
    tile_b_given = tile_b is not None
    vmem_cap, budget = _vmem_budget_bytes()

    # Per-element VMEM cost: double-buffered input block + ~3 tile-sized
    # int32/native temporaries (iota, tie-select, masked copy) in the kernel.
    bpe = 2 * itemsize + 3 * 4

    v_full = _round_up(V, _LANE)
    b_full = _round_up(B, _SUBLANE)

    # --- tile selection (prefer the whole vocab in one block) ---------------
    if tile_v is None and tile_b is None:
        rows_fit = (budget // (v_full * bpe)) // _SUBLANE * _SUBLANE
        if rows_fit >= _SUBLANE:
            tile_v = v_full                          # single-block reduction
            tile_b = min(b_full, rows_fit, 1024)
        else:
            # Vocab too large for one block even with 8 rows: tile the vocab.
            tile_b = _SUBLANE
            tile_v = max(_LANE,
                         min((budget // (tile_b * bpe)) // _LANE * _LANE, v_full))
    elif tile_v is None:
        tile_b = min(_round_up(tile_b, _SUBLANE), b_full)
        tile_v = max(_LANE,
                     min((budget // (tile_b * bpe)) // _LANE * _LANE, v_full))
    elif tile_b is None:
        tile_v = min(_round_up(tile_v, _LANE), v_full)
        rows_fit = (budget // (tile_v * bpe)) // _SUBLANE * _SUBLANE
        tile_b = min(b_full, max(_SUBLANE, rows_fit), 1024)
    else:
        tile_b = min(_round_up(tile_b, _SUBLANE), b_full)
        tile_v = min(_round_up(tile_v, _LANE), v_full)

    # Give v7x's second TensorCore work: >=2 blocks on the parallel batch axis
    # when the batch is large enough (harmless extra grid step on 1-TC chips).
    if (not tile_b_given) and B >= 2 * _SUBLANE and pl.cdiv(B, tile_b) == 1:
        tile_b = _round_up(pl.cdiv(B, 2), _SUBLANE)

    grid = (pl.cdiv(B, tile_b), pl.cdiv(V, tile_v))
    mask_tail = (V % tile_v) != 0

    # Explicit scoped-VMEM limit covering the full footprint (+ headroom).
    in_block = tile_b * tile_v * itemsize
    temporaries = 3 * tile_b * tile_v * 4
    out_blocks = 2 * 2 * tile_b * _OUT_LANES * (4 + itemsize)
    footprint = 2 * in_block + temporaries + out_blocks + tile_b * (4 + 4)
    vmem_limit = int(min(vmem_cap,
                         max(footprint + 8 * 1024 * 1024, 32 * 1024 * 1024)))

    kernel = functools.partial(_sample_next_word_kernel,
                               v_total=V, tile_v=tile_v, mask_tail=mask_tail)

    cost = pl.CostEstimate(
        flops=2 * B * V,                      # max + tie-compare per element
        transcendentals=0,
        bytes_accessed=B * V * itemsize + B * _OUT_LANES * (4 + itemsize),
    )

    # TODO(synk): if xprof ever shows exposed DMA on a many-block vocab loop,
    # add pipeline_mode=pl.Buffered(3) to the input BlockSpec.
    it_slab, val_slab = pl.pallas_call(
        kernel,
        out_shape=(
            jax.ShapeDtypeStruct((B, _OUT_LANES), jnp.int32),
            jax.ShapeDtypeStruct((B, _OUT_LANES), logprobs.dtype),
        ),
        grid_spec=pltpu.PrefetchScalarGridSpec(
            num_scalar_prefetch=0,
            grid=grid,
            in_specs=[pl.BlockSpec((tile_b, tile_v), lambda i, k: (i, k))],
            out_specs=(
                pl.BlockSpec((tile_b, _OUT_LANES), lambda i, k: (i, 0)),
                pl.BlockSpec((tile_b, _OUT_LANES), lambda i, k: (i, 0)),
            ),
            scratch_shapes=[
                pltpu.VMEM((tile_b, 1), jnp.float32),   # running row max (f32 carry)
                pltpu.VMEM((tile_b, 1), jnp.int32),     # running row argmax
            ],
        ),
        compiler_params=pltpu.CompilerParams(
            dimension_semantics=("parallel", "arbitrary"),
            vmem_limit_bytes=vmem_limit,
        ),
        cost_estimate=cost,
    )(logprobs)

    # it.view(-1): torch.max(dim=1) returns 1-D; take lane 0 of the slabs.
    # TODO(synk): torch returns int64 indices (.long()); int32 is used here
    # (JAX x32 default) — fine for any realistic vocab size.
    return it_slab[:, 0], val_slab[:, 0]


class MyCaptionPallas:
    """JAX/Pallas port of MyCaption: dispatching forward + sample_next_word."""

    def __init__(self):
        self.mode = None
        # MyCaption.__init__ defines no parameters; nothing to initialize.

    def forward(self, *args, **kwargs):
        mode = kwargs.get("mode", "forward")
        if "mode" in kwargs:
            del kwargs["mode"]
        return getattr(self, "_" + mode)(*args, **kwargs)

    __call__ = forward

    # Expose sample_next_word also as a mode target (`mode='sample_next_word'`).
    def _sample_next_word(self, logprobs):
        return self.sample_next_word(logprobs)

    def sample_next_word(self, logprobs):
        it, sample_logprobs = sample_next_word_pallas(logprobs)
        return (it, sample_logprobs)

    # TODO(synk): the original `forward` dispatches to `_<mode>` methods defined
    # only in subclasses (not part of this module); only the dispatch and
    # sample_next_word are implemented here.


if __name__ == "__main__":
    key = jax.random.PRNGKey(0)
    k1, k2, k3 = jax.random.split(key, 3)
    model = MyCaptionPallas()

    # --- Test 1: aligned shapes, f32, whole vocab in one block, no tail mask -
    B, V = 8, 256
    lp1 = jax.nn.log_softmax(jax.random.normal(k1, (B, V), jnp.float32), axis=-1)
    it1, val1 = model.forward(lp1, mode="sample_next_word")
    it1, val1 = jax.block_until_ready((it1, val1))

    assert it1.shape == (B,) and val1.shape == (B,)
    assert it1.dtype == jnp.int32
    assert bool(jnp.all(it1 == jnp.argmax(lp1, axis=1).astype(jnp.int32)))
    assert bool(jnp.allclose(val1, jnp.max(lp1, axis=1), atol=1e-6))

    # --- Test 2: ragged V, bf16 input, forced multi-block vocab reduction ----
    B2, V2 = 6, 1000
    lp2 = jax.nn.log_softmax(
        jax.random.normal(k2, (B2, V2), jnp.float32), axis=-1
    ).astype(jnp.bfloat16)
    it2, val2 = sample_next_word_pallas(lp2, tile_v=256)  # forces 4 vocab blocks
    it2, val2 = jax.block_until_ready((it2, val2))

    ref_val2 = jnp.max(lp2, axis=1)
    assert it2.shape == (B2,) and val2.shape == (B2,)
    assert val2.dtype == lp2.dtype
    assert bool(jnp.all(val2 == ref_val2))
    assert bool(jnp.all((it2 >= 0) & (it2 < V2)))
    gathered = jnp.take_along_axis(lp2, it2[:, None], axis=1)[:, 0]
    assert bool(jnp.all(gathered == ref_val2))

    # --- Test 3: ragged V, default single-block tiling with a padded tail ----
    B3, V3 = 4, 300
    lp3 = jax.nn.log_softmax(jax.random.normal(k3, (B3, V3), jnp.float32), axis=-1)
    it3, val3 = model.sample_next_word(lp3)
    it3, val3 = jax.block_until_ready((it3, val3))
    assert bool(jnp.all(it3 == jnp.argmax(lp3, axis=1).astype(jnp.int32)))
    assert bool(jnp.allclose(val3, jnp.max(lp3, axis=1), atol=1e-6))

    print("KERNEL_OK")
</pallas_src>

<mosaic_0001>
module attributes {stable_mosaic.version = 11 : i64} {
  func.func @_sample_next_word_kernel(%arg0: i32, %arg1: i32, %arg2: memref<8x256xf32, #tpu.memory_space<vmem>>, %arg3: memref<8x128xi32, #tpu.memory_space<vmem>>, %arg4: memref<8x128xf32, #tpu.memory_space<vmem>>, %arg5: memref<8x1xf32, #tpu.memory_space<vmem>>, %arg6: memref<8x1xi32, #tpu.memory_space<vmem>>) attributes {dimension_semantics = [#tpu.dimension_semantics<parallel>, #tpu.dimension_semantics<arbitrary>], iteration_bounds = array<i64: 1, 1>, scalar_prefetch = 0 : i64, scratch_operands = 2 : i64, tpu.core_type = #tpu.core_type<tc>, window_params = [{transform_indices = @transform_0, window_bounds = array<i64: 8, 256>}, {transform_indices = @transform_1, window_bounds = array<i64: 8, 128>}, {transform_indices = @transform_2, window_bounds = array<i64: 8, 128>}]} {
    %c0_i32 = arith.constant 0 : i32
    %0 = arith.cmpi eq, %arg1, %c0_i32 : i32
    %1 = arith.extui %0 : i1 to i32
    %c0_i32_0 = arith.constant 0 : i32
    %2 = arith.cmpi ne, %1, %c0_i32_0 : i32
    scf.if %2 {
      %cst_15 = arith.constant 0xFF800000 : f32
      %27 = vector.broadcast %cst_15 : f32 to vector<8x1xf32>
      %c0_16 = arith.constant 0 : index
      %c0_17 = arith.constant 0 : index
      %28 = vector.load %arg5[%c0_16, %c0_17] : memref<8x1xf32, #tpu.memory_space<vmem>>, vector<8x1xf32>
      tpu.vector_store %arg5[%c0_16, %c0_17], %27 {strides = array<i32>} : memref<8x1xf32, #tpu.memory_space<vmem>>, vector<8x1xf32>,
      %c0_i32_18 = arith.constant 0 : i32
      %29 = vector.broadcast %c0_i32_18 : i32 to vector<8x1xi32>
      %c0_19 = arith.constant 0 : index
      %c0_20 = arith.constant 0 : index
      %30 = vector.load %arg6[%c0_19, %c0_20] : memref<8x1xi32, #tpu.memory_space<vmem>>, vector<8x1xi32>
      tpu.vector_store %arg6[%c0_19, %c0_20], %29 {strides = array<i32>} : memref<8x1xi32, #tpu.memory_space<vmem>>, vector<8x1xi32>,
    } else {
    }
    %c0 = arith.constant 0 : index
    %c0_1 = arith.constant 0 : index
    %3 = vector.load %arg2[%c0, %c0_1] : memref<8x256xf32, #tpu.memory_space<vmem>>, vector<8x256xf32>
    %4 = tpu.iota {dimensions = array<i32: 1>} : vector<8x256xi32>
    %cst = arith.constant dense<0xFF800000> : vector<8xf32>
    %5 = vector.multi_reduction <maximumf>, %3, %cst [1] : vector<8x256xf32> to vector<8xf32>
    %6 = vector.shape_cast %5 : vector<8xf32> to vector<8x1xf32>
    %7 = vector.broadcast %6 : vector<8x1xf32> to vector<8x256xf32>
    %8 = arith.cmpf oeq, %3, %7 : vector<8x256xf32>
    %c2147483647_i32 = arith.constant 2147483647 : i32
    %9 = vector.broadcast %c2147483647_i32 : i32 to vector<8x256xi32>
    %10 = arith.select %8, %4, %9 : vector<8x256xi1>, vector<8x256xi32>
    %cst_2 = arith.constant dense<2147483647> : vector<8xi32>
    %11 = vector.multi_reduction <minsi>, %10, %cst_2 [1] : vector<8x256xi32> to vector<8xi32>
    %12 = vector.shape_cast %11 : vector<8xi32> to vector<8x1xi32>
    %c256_i32 = arith.constant 256 : i32
    %13 = arith.muli %arg1, %c256_i32 : i32
    %14 = vector.broadcast %13 : i32 to vector<8x1xi32>
    %15 = arith.addi %12, %14 : vector<8x1xi32>
    %c0_3 = arith.constant 0 : index
    %c0_4 = arith.constant 0 : index
    %16 = vector.load %arg5[%c0_3, %c0_4] : memref<8x1xf32, #tpu.memory_space<vmem>>, vector<8x1xf32>
    %17 = arith.cmpf ogt, %6, %16 : vector<8x1xf32>
    %c0_5 = arith.constant 0 : index
    %c0_6 = arith.constant 0 : index
    %18 = vector.load %arg6[%c0_5, %c0_6] : memref<8x1xi32, #tpu.memory_space<vmem>>, vector<8x1xi32>
    %19 = arith.select %17, %15, %18 : vector<8x1xi1>, vector<8x1xi32>
    %c0_7 = arith.constant 0 : index
    %c0_8 = arith.constant 0 : index
    %20 = vector.load %arg6[%c0_7, %c0_8] : memref<8x1xi32, #tpu.memory_space<vmem>>, vector<8x1xi32>
    tpu.vector_store %arg6[%c0_7, %c0_8], %19 {strides = array<i32>} : memref<8x1xi32, #tpu.memory_space<vmem>>, vector<8x1xi32>,
    %c0_9 = arith.constant 0 : index
    %c0_10 = arith.constant 0 : index
    %21 = vector.load %arg5[%c0_9, %c0_10] : memref<8x1xf32, #tpu.memory_space<vmem>>, vector<8x1xf32>
    %22 = arith.select %17, %6, %21 : vector<8x1xi1>, vector<8x1xf32>
    %c0_11 = arith.constant 0 : index
    %c0_12 = arith.constant 0 : index
    %23 = vector.load %arg5[%c0_11, %c0_12] : memref<8x1xf32, #tpu.memory_space<vmem>>, vector<8x1xf32>
    tpu.vector_store %arg5[%c0_11, %c0_12], %22 {strides = array<i32>} : memref<8x1xf32, #tpu.memory_space<vmem>>, vector<8x1xf32>,
    %c0_i32_13 = arith.constant 0 : i32
    %24 = arith.cmpi eq, %arg1, %c0_i32_13 : i32
    %25 = arith.extui %24 : i1 to i32
    %c0_i32_14 = arith.constant 0 : i32
    %26 = arith.cmpi ne, %25, %c0_i32_14 : i32
    scf.if %26 {
      %c0_15 = arith.constant 0 : index
      %c0_16 = arith.constant 0 : index
      %27 = vector.load %arg6[%c0_15, %c0_16] : memref<8x1xi32, #tpu.memory_space<vmem>>, vector<8x1xi32>
      %28 = vector.shape_cast %27 : vector<8x1xi32> to vector<8x1xi32>
      %29 = vector.broadcast %28 : vector<8x1xi32> to vector<8x128xi32>
      %c0_17 = arith.constant 0 : index
      %c0_18 = arith.constant 0 : index
      %30 = vector.load %arg3[%c0_17, %c0_18] : memref<8x128xi32, #tpu.memory_space<vmem>>, vector<8x128xi32>
      tpu.vector_store %arg3[%c0_17, %c0_18], %29 {strides = array<i32>} : memref<8x128xi32, #tpu.memory_space<vmem>>, vector<8x128xi32>,
      %c0_19 = arith.constant 0 : index
      %c0_20 = arith.constant 0 : index
      %31 = vector.load %arg5[%c0_19, %c0_20] : memref<8x1xf32, #tpu.memory_space<vmem>>, vector<8x1xf32>
      %32 = vector.shape_cast %31 : vector<8x1xf32> to vector<8x1xf32>
      %33 = vector.broadcast %32 : vector<8x1xf32> to vector<8x128xf32>
      %c0_21 = arith.constant 0 : index
      %c0_22 = arith.constant 0 : index
      %34 = vector.load %arg4[%c0_21, %c0_22] : memref<8x128xf32, #tpu.memory_space<vmem>>, vector<8x128xf32>
      tpu.vector_store %arg4[%c0_21, %c0_22], %33 {strides = array<i32>} : memref<8x128xf32, #tpu.memory_space<vmem>>, vector<8x128xf32>,
    } else {
    }
    return
  }
  func.func @transform_0(%arg0: i32, %arg1: i32) -> (i32, i32) {
    %c0_i32 = arith.constant 0 : i32
    return %arg0, %arg1 : i32, i32
  }
  func.func @transform_1(%arg0: i32, %arg1: i32) -> (i32, i32) {
    %c0_i32 = arith.constant 0 : i32
    %c0_i32_0 = arith.constant 0 : i32
    return %arg0, %c0_i32 : i32, i32
  }
  func.func @transform_2(%arg0: i32, %arg1: i32) -> (i32, i32) {
    %c0_i32 = arith.constant 0 : i32
    %c0_i32_0 = arith.constant 0 : i32
    return %arg0, %c0_i32 : i32, i32
  }
}

</mosaic_0001>

<llo_original>
// kernel: tpu_custom_call.1
$region0: #{tpu_custom_call.1}
  #allocation0 [shape = 'u32[]', space=smem, size = 0x4, offset = 0x4, fixed_abs, tag = 'smem constant byte address 0x4 - core index']
  #allocation1 [shape = 'u32[144,128]{1,0:T(1,128)}', space=vmem, size = 0x12000, scoped, tag = 'internal scratch']
  #allocation2 [shape = 'f32[8,1]{1,0:T(8,128)}', space=vmem, size = 0x1000, scoped, tag = 'scratch operand']
  #allocation3 [shape = 's32[8,1]{1,0:T(8,128)}', space=vmem, size = 0x1000, scoped, tag = 'scratch operand']
  %s0 = inlined_call_operand.hbm [shape: f32[8,256], index: 0, kind: input, shape index: {}]
  %s1 = inlined_call_operand.hbm [shape: s32[8,128], index: 1, kind: output, shape index: {0}]
  %s2 = inlined_call_operand.hbm [shape: f32[8,128], index: 2, kind: output, shape index: {1}]
  %3 = xla_tuple %s1, %s2
  %s4 = sld [smem:[#allocation0]]
  $region34: #{tpu_custom_call.1} parent=0
    _
  %s6 = ssub.s32 1, %s4
  %s7 = scalar_select 0, %s6, %s4
  $region1: #{tpu_custom_call.1} parent=0
    #allocation4 [shape = 'u8[8192]{0}', space=vmem, size = 0x2000, scoped, tag = 'input window, operand 0, single buffered']
    #allocation5 [shape = 's32[1]{0}', space=sflag, size = 0x4, scoped, tag = 'scoped memory for tpu_custom_call.1']
    #allocation6 [shape = 's32[1]{0}', space=sflag, size = 0x4, scoped, tag = 'scoped memory for tpu_custom_call.1']
    #allocation7 [shape = 'u8[4096]{0}', space=vmem, size = 0x1000, scoped, tag = 'output window, operand 0, single buffered']
    #allocation8 [shape = 'u8[4096]{0}', space=vmem, size = 0x1000, scoped, tag = 'output window, operand 1, single buffered']
    #allocation9 [shape = 's32[1]{0}', space=sflag, size = 0x4, scoped, tag = 'scoped memory for tpu_custom_call.1']
    %8 = vsyncpa [#allocation5], 0
    %9 = vsyncpa [#allocation6], 0
    %10 = vsyncpa [#allocation9], 0
    // Predicated region
    $region2: #{tpu_custom_call.1} parent=1 // pred_check
      _
    $region3: #{tpu_custom_call.1} parent=1 // pred_check_branch
      %12 = sbr.rel (0) target = $region5
    $region4: #{tpu_custom_call.1} parent=1 // pred_region
      %s14 = ssub.s32 256, 256
      %15 = vsyncadd [#allocation5], %s14
      %s17 = sshll.u32 [#allocation4], 4
      %s18 = int_to_ptr.vmem [resolvable:$true] %s17
      %20 = dma.hbm_to_vmem [thread:$0]  %s0, 256, %s18, [#allocation5]
    $region5: #{tpu_custom_call.1} parent=1 // pred_fallthru
      _
    // Predicated region
    $region6: #{tpu_custom_call.1} parent=1 // pred_check
      _
    $region7: #{tpu_custom_call.1} parent=1 // pred_check_branch
      %22 = sbr.rel (0) target = $region9
    $region8: #{tpu_custom_call.1} parent=1 // pred_region
      %23 = dma.done [#allocation5], 256
    $region9: #{tpu_custom_call.1} parent=1 // pred_fallthru
      _
    %p24 = scmp.eq.s32.totalorder 0, 0
    // Predicated region
    $region10: #{tpu_custom_call.1} parent=1 // pred_check
      %p25 = pneg %p24
    $region11: #{tpu_custom_call.1} parent=1 // pred_check_branch
      %27 = sbr.rel (%p25) target = $region13
    $region12: #{tpu_custom_call.1} parent=1 // pred_region
      %vm28 = vcmask 7168
      %29 = vst.msk [vmem:[#allocation2] sm:$0xff] %vm28, -inf
      %30 = vst.msk [vmem:[#allocation3] sm:$0xff] %vm28, 0
    $region13: #{tpu_custom_call.1} parent=1 // pred_fallthru
      _
    %v31 = vld [vmem:[#allocation4] sm:$0xff]
    %v32 = vld [vmem:[#allocation4 + $0x8] sm:$0xff]
    %v33 = vlaneseq
    %v34 = vand.u32 %v33, 127
    %v35 = vadd.s32 %v34, 128
    %v36 = vmax.f32 %v31, %v32
    %37 = vmax.xlane.f32.xlu0 %v36
    %v38 = vpop.xlane.xlu0 %37
    %vm39 = vcmp.eq.f32.partialorder %v31, %v38
    %vm40 = vcmp.eq.f32.partialorder %v32, %v38
    %v41 = vsel %vm39, %v34, 2147483647
    %v42 = vsel %vm40, %v35, 2147483647
    %vm43 = vcmp.lt.s32.totalorder %v41, %v42
    %v44 = vsel %vm43, %v41, %v42
    %v45 = vand.u32 %v44, 65535
    %v46 = vshra.s32 %v44, 16
    %v47 = vcvt.s32.f32 %v45
    %v48 = vcvt.s32.f32 %v46
    %49 = vmin.xlane.f32.xlu0 %v48
    %v50 = vpop.xlane.xlu0 %49
    %vm51 = vcmp.eq.f32.partialorder %v48, %v50
    %v52 = vsel %vm51, %v47, inf
    %53 = vmin.xlane.f32.xlu0 %v52
    %v54 = vpop.xlane.xlu0 %53
    %v55 = vcvt.f32.s32 %v54
    %v56 = vcvt.f32.s32 %v50
    %v57 = vshll.u32 %v56, 16
    %v58 = vadd.s32 %v57, %v55
    %s59 = smul.u32 0, 256
    %v60 = vstv %s59
    %v61 = vadd.s32 %v58, %v60
    %v62 = vld [vmem:[#allocation2] sm:$0xff]
    %vm63 = vcmp.gt.f32.partialorder %v38, %v62
    %v64 = vld [vmem:[#allocation3] sm:$0xff]
    %v65 = vsel %vm63, %v61, %v64
    %vm66 = vcmask 7168
    %67 = vst.msk [vmem:[#allocation3] sm:$0xff] %vm66, %v65
    %v68 = vld [vmem:[#allocation2] sm:$0xff]
    %v69 = vsel %vm63, %v38, %v68
    %70 = vst.msk [vmem:[#allocation2] sm:$0xff] %vm66, %v69
    // Predicated region
    $region14: #{tpu_custom_call.1} parent=1 // pred_check
      %p71 = pneg %p24
    $region15: #{tpu_custom_call.1} parent=1 // pred_check_branch
      %73 = sbr.rel (%p71) target = $region17
    $region16: #{tpu_custom_call.1} parent=1 // pred_region
      %v74 = vld [vmem:[#allocation3] sm:$0xff]
      %75 = vset.pattern.permute.xlu0 0
      %76 = vperm.xlu0 %75, %v74
      %v77 = vpop.permute.xlu0 %76
      %78 = vst [vmem:[#allocation7] sm:$0xff] %v77
      %v79 = vld [vmem:[#allocation2] sm:$0xff]
      %81 = vset.pattern.permute.xlu0 0
      %82 = vperm.xlu0 %81, %v79
      %v83 = vpop.permute.xlu0 %82
      %85 = vst [vmem:[#allocation8] sm:$0xff] %v83
    $region17: #{tpu_custom_call.1} parent=1 // pred_fallthru
      _
    // Predicated region
    $region18: #{tpu_custom_call.1} parent=1 // pred_check
      _
    $region19: #{tpu_custom_call.1} parent=1 // pred_check_branch
      %87 = sbr.rel (0) target = $region21
    $region20: #{tpu_custom_call.1} parent=1 // pred_region
      %s89 = ssub.s32 128, 128
      %90 = vsyncadd [#allocation6], %s89
      %s92 = sshll.u32 [#allocation7], 4
      %s93 = int_to_ptr.vmem [resolvable:$true] %s92
      %95 = dma.vmem_to_hbm [thread:$0]  %s93, 128, %s1, [#allocation6]
    $region21: #{tpu_custom_call.1} parent=1 // pred_fallthru
      _
    // Predicated region
    $region22: #{tpu_custom_call.1} parent=1 // pred_check
      _
    $region23: #{tpu_custom_call.1} parent=1 // pred_check_branch
      %97 = sbr.rel (0) target = $region25
    $region24: #{tpu_custom_call.1} parent=1 // pred_region
      %s99 = ssub.s32 128, 128
      %100 = vsyncadd [#allocation9], %s99
      %s102 = sshll.u32 [#allocation8], 4
      %s103 = int_to_ptr.vmem [resolvable:$true] %s102
      %105 = dma.vmem_to_hbm [thread:$0]  %s103, 128, %s2, [#allocation9]
    $region25: #{tpu_custom_call.1} parent=1 // pred_fallthru
      _
    // Predicated region
    $region26: #{tpu_custom_call.1} parent=1 // pred_check
      _
    $region27: #{tpu_custom_call.1} parent=1 // pred_check_branch
      %107 = sbr.rel (0) target = $region29
    $region28: #{tpu_custom_call.1} parent=1 // pred_region
      %108 = dma.done [#allocation6], 128
    $region29: #{tpu_custom_call.1} parent=1 // pred_fallthru
      _
    // Predicated region
    $region30: #{tpu_custom_call.1} parent=1 // pred_check
      _
    $region31: #{tpu_custom_call.1} parent=1 // pred_check_branch
      %110 = sbr.rel (0) target = $region33
    $region32: #{tpu_custom_call.1} parent=1 // pred_region
      %111 = dma.done [#allocation9], 128
    $region33: #{tpu_custom_call.1} parent=1 // pred_fallthru
      _
    %112 = vsyncpa [#allocation5], 1
    %113 = vsyncpa [#allocation6], 1
    %114 = vsyncpa [#allocation9], 1

</llo_original>
